<compile_context>
chip_gen: v5e
topology: v5e:2x2
jax: 0.10.0
libtpu: 0.0.40
codegen_flags: <defaults>
</compile_context>

<pallas_src>
import jax
import jax.numpy as jnp
from jax.experimental import pallas as pl
from jax.experimental.pallas import tpu as pltpu

MARGIN = 0.3


def _round_up(v, m):
    return (v + m - 1) // m * m


def _choose_row_tile(n, d):
    """Row-block size: multiple of 8, >=2 blocks when possible (v7x dual-TC),
    small enough that per-step VMEM stays a few MiB on every TPU generation."""
    if n >= 16:
        tm = _round_up(-(-n // 2), 8)
    else:
        tm = _round_up(max(n, 1), 8)
    tm = min(tm, 256)
    cap_x = max(8, ((4 * 1024 * 1024) // (4 * max(d, 1))) // 8 * 8)  # (tm,d) x-block <= 4 MiB
    cap_m = max(8, ((512 * 1024) // max(n, 1)) // 8 * 8)             # (tm,~N) mining temps <= ~8 MiB
    return max(8, min(tm, cap_x, cap_m))


# ---------------------------------------------------------------------------
# Kernel 1: squared row norms.  The ONLY pass that touches x (O(N*D), HBM-bound).
# ---------------------------------------------------------------------------
def _row_sqnorm_kernel(x_ref, sq_ref):
    x = x_ref[...]                                            # (tm, d) f32
    sq_ref[...] = jnp.sum(x * x, axis=1, keepdims=True)       # (tm, 1)


# ---------------------------------------------------------------------------
# Kernel 2: per-class max/min of sq + hinge + fused sum.
# Row-tiled grid, no column axis; output is a single resident (1,1) accumulator.
# ---------------------------------------------------------------------------
def _mine_hinge_kernel(sq_row_ref, t_row_ref, v_row_ref,
                       sq_col_ref, t_col_ref, v_col_ref, out_ref):
    i = pl.program_id(0)

    @pl.when(i == 0)
    def _():
        out_ref[...] = jnp.zeros_like(out_ref)

    # Positive mask for this block of rows; padded columns excluded.
    mask = (t_col_ref[...] == t_row_ref[...]) & (v_row_ref[...] != 0)   # (tm, N)

    sq_row = sq_row_ref[...]                                            # (1, N)
    neg_inf = jnp.float32(-jnp.inf)
    pos_inf = jnp.float32(jnp.inf)
    cls_max = jnp.max(jnp.where(mask, sq_row, neg_inf), axis=1, keepdims=True)  # (tm,1)
    cls_min = jnp.min(jnp.where(mask, sq_row, pos_inf), axis=1, keepdims=True)  # (tm,1)

    # sqrt/clamp is monotone, so it is applied AFTER mining (2N EUP sqrts total).
    eps = jnp.float32(1e-12)
    sq_col = sq_col_ref[...]                                            # (tm, 1)
    dist_ap = jnp.sqrt(jnp.maximum(sq_col + cls_max, eps))
    dist_an = jnp.sqrt(jnp.maximum(sq_col + cls_min, eps))
    hinge = jnp.maximum(dist_ap - dist_an + jnp.float32(MARGIN), jnp.float32(0.0))
    hinge = jnp.where(v_col_ref[...] != 0, hinge, jnp.float32(0.0))     # drop padded rows

    out_ref[...] += jnp.sum(hinge, axis=0, keepdims=True)               # (1, 1)


# ---------------------------------------------------------------------------
# Wrapper
# ---------------------------------------------------------------------------
@jax.jit
def triplet_loss(inputs, targets):
    """inputs: (N, D) float features, targets: (N,) int labels -> scalar loss."""
    n, d = inputs.shape
    x = inputs.astype(jnp.float32)
    t = targets.astype(jnp.int32)

    tm = _choose_row_tile(n, d)
    nr = _round_up(n, tm)

    # --- O(N*D) row-norm pass (x is never read again) ----------------------
    x_pad = x if nr == n else jnp.pad(x, ((0, nr - n), (0, 0)))
    sq = pl.pallas_call(
        _row_sqnorm_kernel,
        out_shape=jax.ShapeDtypeStruct((nr, 1), jnp.float32),
        grid=(nr // tm,),
        in_specs=[pl.BlockSpec((tm, d), lambda i: (i, 0))],
        out_specs=pl.BlockSpec((tm, 1), lambda i: (i, 0)),
        compiler_params=pltpu.CompilerParams(
            dimension_semantics=("parallel",)),
    )(x_pad)                                                            # (nr, 1)

    # --- tiny O(N) side vectors for the mining kernel ----------------------
    t_pad = t if nr == n else jnp.pad(t, (0, nr - n))
    valid = (jnp.arange(nr) < n).astype(jnp.int32)
    sq_row, t_row, v_row = sq.reshape(1, nr), t_pad.reshape(1, nr), valid.reshape(1, nr)
    sq_col, t_col, v_col = sq, t_pad.reshape(nr, 1), valid.reshape(nr, 1)

    # --- per-class max/min + hinge + fused sum (no column grid axis) -------
    total = pl.pallas_call(
        _mine_hinge_kernel,
        out_shape=jax.ShapeDtypeStruct((1, 1), jnp.float32),
        grid=(nr // tm,),
        in_specs=[
            pl.BlockSpec((1, nr), lambda i: (0, 0)),   # sq as a lane-dense row
            pl.BlockSpec((1, nr), lambda i: (0, 0)),   # labels (row)
            pl.BlockSpec((1, nr), lambda i: (0, 0)),   # column validity
            pl.BlockSpec((tm, 1), lambda i: (i, 0)),   # sq for this row block
            pl.BlockSpec((tm, 1), lambda i: (i, 0)),   # labels (column block)
            pl.BlockSpec((tm, 1), lambda i: (i, 0)),   # row validity block
        ],
        out_specs=pl.BlockSpec((1, 1), lambda i: (0, 0)),
        compiler_params=pltpu.CompilerParams(
            dimension_semantics=("arbitrary",)),
    )(sq_row, t_row, v_row, sq_col, t_col, v_col)

    # MarginRankingLoss reduction='mean' over the n real rows.
    return total[0, 0] / jnp.float32(n)


# Pure-JAX reference of the (quirky) PyTorch forward, for a self-check.
def _reference(inputs, targets):
    x = inputs.astype(jnp.float32)
    sq = jnp.sum(x * x, axis=1, keepdims=True)
    dist = jnp.sqrt(jnp.maximum(sq + sq.T, 1e-12))   # addmm result discarded in the ref
    mask = targets[:, None] == targets[None, :]
    dist_ap = jnp.max(jnp.where(mask, dist, -jnp.inf), axis=1)
    dist_an = jnp.min(jnp.where(mask, dist, jnp.inf), axis=1)
    return jnp.mean(jnp.maximum(dist_ap - dist_an + MARGIN, 0.0))


if __name__ == "__main__":
    key = jax.random.PRNGKey(0)
    k1, k2, k3, k4 = jax.random.split(key, 4)

    # Small case: single row block.
    n, d = 8, 32
    inputs = jax.random.normal(k1, (n, d), dtype=jnp.float32)
    targets = jax.random.randint(k2, (n,), 0, 4, dtype=jnp.int32)
    loss = triplet_loss(inputs, targets)
    jax.block_until_ready(loss)
    ref = _reference(inputs, targets)
    assert abs(float(loss) - float(ref)) < 1e-4, (float(loss), float(ref))

    # Slightly larger case: exercises multi-block grid + row padding.
    n2, d2 = 24, 32
    inputs2 = jax.random.normal(k3, (n2, d2), dtype=jnp.float32)
    targets2 = jax.random.randint(k4, (n2,), 0, 6, dtype=jnp.int32)
    loss2 = triplet_loss(inputs2, targets2)
    jax.block_until_ready(loss2)
    ref2 = _reference(inputs2, targets2)
    assert abs(float(loss2) - float(ref2)) < 1e-4, (float(loss2), float(ref2))

    print("KERNEL_OK")
</pallas_src>

<mosaic_0001>
module attributes {stable_mosaic.version = 11 : i64} {
  func.func @_row_sqnorm_kernel(%arg0: i32, %arg1: memref<8x32xf32, #tpu.memory_space<vmem>>, %arg2: memref<8x1xf32, #tpu.memory_space<vmem>>) attributes {dimension_semantics = [#tpu.dimension_semantics<parallel>], iteration_bounds = array<i64: 1>, scalar_prefetch = 0 : i64, scratch_operands = 0 : i64, tpu.core_type = #tpu.core_type<tc>, window_params = [{transform_indices = @transform_0, window_bounds = array<i64: 8, 32>}, {transform_indices = @transform_1, window_bounds = array<i64: 8, 1>}]} {
    %c0 = arith.constant 0 : index
    %c0_0 = arith.constant 0 : index
    %0 = vector.load %arg1[%c0, %c0_0] : memref<8x32xf32, #tpu.memory_space<vmem>>, vector<8x32xf32>
    %1 = arith.mulf %0, %0 : vector<8x32xf32>
    %cst = arith.constant dense<0.000000e+00> : vector<8xf32>
    %2 = vector.multi_reduction <add>, %1, %cst [1] : vector<8x32xf32> to vector<8xf32>
    %3 = vector.shape_cast %2 : vector<8xf32> to vector<8x1xf32>
    %c0_1 = arith.constant 0 : index
    %c0_2 = arith.constant 0 : index
    %4 = vector.load %arg2[%c0_1, %c0_2] : memref<8x1xf32, #tpu.memory_space<vmem>>, vector<8x1xf32>
    tpu.vector_store %arg2[%c0_1, %c0_2], %3 {strides = array<i32>} : memref<8x1xf32, #tpu.memory_space<vmem>>, vector<8x1xf32>,
    return
  }
  func.func @transform_0(%arg0: i32) -> (i32, i32) {
    %c0_i32 = arith.constant 0 : i32
    %c0_i32_0 = arith.constant 0 : i32
    return %arg0, %c0_i32 : i32, i32
  }
  func.func @transform_1(%arg0: i32) -> (i32, i32) {
    %c0_i32 = arith.constant 0 : i32
    %c0_i32_0 = arith.constant 0 : i32
    return %arg0, %c0_i32 : i32, i32
  }
}

module attributes {stable_mosaic.version = 11 : i64} {
  func.func @_mine_hinge_kernel(%arg0: i32, %arg1: memref<1x8xf32, #tpu.memory_space<vmem>>, %arg2: memref<1x8xi32, #tpu.memory_space<vmem>>, %arg3: memref<1x8xi32, #tpu.memory_space<vmem>>, %arg4: memref<8x1xf32, #tpu.memory_space<vmem>>, %arg5: memref<8x1xi32, #tpu.memory_space<vmem>>, %arg6: memref<8x1xi32, #tpu.memory_space<vmem>>, %arg7: memref<1x1xf32, #tpu.memory_space<vmem>>) attributes {dimension_semantics = [#tpu.dimension_semantics<arbitrary>], iteration_bounds = array<i64: 1>, scalar_prefetch = 0 : i64, scratch_operands = 0 : i64, tpu.core_type = #tpu.core_type<tc>, window_params = [{pipeline_mode = #tpu.pipeline_mode<synchronous>, transform_indices = @transform_0, window_bounds = array<i64: 1, 8>}, {pipeline_mode = #tpu.pipeline_mode<synchronous>, transform_indices = @transform_1, window_bounds = array<i64: 1, 8>}, {pipeline_mode = #tpu.pipeline_mode<synchronous>, transform_indices = @transform_2, window_bounds = array<i64: 1, 8>}, {transform_indices = @transform_3, window_bounds = array<i64: 8, 1>}, {transform_indices = @transform_4, window_bounds = array<i64: 8, 1>}, {transform_indices = @transform_5, window_bounds = array<i64: 8, 1>}, {pipeline_mode = #tpu.pipeline_mode<synchronous>, transform_indices = @transform_6, window_bounds = array<i64: 1, 1>}]} {
    %c0_i32 = arith.constant 0 : i32
    %0 = arith.cmpi eq, %arg0, %c0_i32 : i32
    %1 = arith.extui %0 : i1 to i32
    %c0_i32_0 = arith.constant 0 : i32
    %2 = arith.cmpi ne, %1, %c0_i32_0 : i32
    scf.if %2 {
      %cst_27 = arith.constant 0.000000e+00 : f32
      %50 = vector.broadcast %cst_27 : f32 to vector<1x1xf32>
      %c0_28 = arith.constant 0 : index
      %c0_29 = arith.constant 0 : index
      %51 = vector.load %arg7[%c0_28, %c0_29] : memref<1x1xf32, #tpu.memory_space<vmem>>, vector<1x1xf32>
      tpu.vector_store %arg7[%c0_28, %c0_29], %50 {strides = array<i32>} : memref<1x1xf32, #tpu.memory_space<vmem>>, vector<1x1xf32>,
    } else {
    }
    %c0 = arith.constant 0 : index
    %c0_1 = arith.constant 0 : index
    %3 = vector.load %arg5[%c0, %c0_1] : memref<8x1xi32, #tpu.memory_space<vmem>>, vector<8x1xi32>
    %c0_2 = arith.constant 0 : index
    %c0_3 = arith.constant 0 : index
    %4 = vector.load %arg2[%c0_2, %c0_3] : memref<1x8xi32, #tpu.memory_space<vmem>>, vector<1x8xi32>
    %5 = vector.broadcast %3 : vector<8x1xi32> to vector<8x8xi32>
    %6 = vector.broadcast %4 : vector<1x8xi32> to vector<8x8xi32>
    %7 = arith.cmpi eq, %5, %6 : vector<8x8xi32>
    %c0_4 = arith.constant 0 : index
    %c0_5 = arith.constant 0 : index
    %8 = vector.load %arg3[%c0_4, %c0_5] : memref<1x8xi32, #tpu.memory_space<vmem>>, vector<1x8xi32>
    %c0_i32_6 = arith.constant 0 : i32
    %9 = vector.broadcast %c0_i32_6 : i32 to vector<1x8xi32>
    %10 = arith.cmpi ne, %8, %9 : vector<1x8xi32>
    %11 = vector.broadcast %10 : vector<1x8xi1> to vector<8x8xi1>
    %12 = arith.andi %7, %11 : vector<8x8xi1>
    %c0_7 = arith.constant 0 : index
    %c0_8 = arith.constant 0 : index
    %13 = vector.load %arg1[%c0_7, %c0_8] : memref<1x8xf32, #tpu.memory_space<vmem>>, vector<1x8xf32>
    %cst = arith.constant 0xFF800000 : f32
    %14 = vector.shape_cast %13 : vector<1x8xf32> to vector<1x8xf32>
    %15 = vector.broadcast %14 : vector<1x8xf32> to vector<8x8xf32>
    %16 = vector.broadcast %cst : f32 to vector<8x8xf32>
    %17 = arith.select %12, %15, %16 : vector<8x8xi1>, vector<8x8xf32>
    %cst_9 = arith.constant dense<0xFF800000> : vector<8xf32>
    %18 = vector.multi_reduction <maximumf>, %17, %cst_9 [1] : vector<8x8xf32> to vector<8xf32>
    %19 = vector.shape_cast %18 : vector<8xf32> to vector<8x1xf32>
    %cst_10 = arith.constant 0x7F800000 : f32
    %20 = vector.shape_cast %13 : vector<1x8xf32> to vector<1x8xf32>
    %21 = vector.broadcast %20 : vector<1x8xf32> to vector<8x8xf32>
    %22 = vector.broadcast %cst_10 : f32 to vector<8x8xf32>
    %23 = arith.select %12, %21, %22 : vector<8x8xi1>, vector<8x8xf32>
    %cst_11 = arith.constant dense<0x7F800000> : vector<8xf32>
    %24 = vector.multi_reduction <minimumf>, %23, %cst_11 [1] : vector<8x8xf32> to vector<8xf32>
    %25 = vector.shape_cast %24 : vector<8xf32> to vector<8x1xf32>
    %c0_12 = arith.constant 0 : index
    %c0_13 = arith.constant 0 : index
    %26 = vector.load %arg4[%c0_12, %c0_13] : memref<8x1xf32, #tpu.memory_space<vmem>>, vector<8x1xf32>
    %27 = arith.addf %26, %19 : vector<8x1xf32>
    %cst_14 = arith.constant 9.99999996E-13 : f32
    %28 = vector.broadcast %cst_14 : f32 to vector<8x1xf32>
    %29 = arith.maximumf %27, %28 : vector<8x1xf32>
    %30 = math.sqrt %29 : vector<8x1xf32>
    %31 = arith.addf %26, %25 : vector<8x1xf32>
    %cst_15 = arith.constant 9.99999996E-13 : f32
    %32 = vector.broadcast %cst_15 : f32 to vector<8x1xf32>
    %33 = arith.maximumf %31, %32 : vector<8x1xf32>
    %34 = math.sqrt %33 : vector<8x1xf32>
    %35 = arith.subf %30, %34 : vector<8x1xf32>
    %cst_16 = arith.constant 3.000000e-01 : f32
    %36 = vector.broadcast %cst_16 : f32 to vector<8x1xf32>
    %37 = arith.addf %35, %36 : vector<8x1xf32>
    %cst_17 = arith.constant 0.000000e+00 : f32
    %38 = vector.broadcast %cst_17 : f32 to vector<8x1xf32>
    %39 = arith.maximumf %37, %38 : vector<8x1xf32>
    %c0_18 = arith.constant 0 : index
    %c0_19 = arith.constant 0 : index
    %40 = vector.load %arg6[%c0_18, %c0_19] : memref<8x1xi32, #tpu.memory_space<vmem>>, vector<8x1xi32>
    %c0_i32_20 = arith.constant 0 : i32
    %41 = vector.broadcast %c0_i32_20 : i32 to vector<8x1xi32>
    %42 = arith.cmpi ne, %40, %41 : vector<8x1xi32>
    %cst_21 = arith.constant 0.000000e+00 : f32
    %43 = vector.broadcast %cst_21 : f32 to vector<8x1xf32>
    %44 = arith.select %42, %39, %43 : vector<8x1xi1>, vector<8x1xf32>
    %c0_22 = arith.constant 0 : index
    %c0_23 = arith.constant 0 : index
    %45 = vector.load %arg7[%c0_22, %c0_23] : memref<1x1xf32, #tpu.memory_space<vmem>>, vector<1x1xf32>
    %cst_24 = arith.constant dense<0.000000e+00> : vector<1xf32>
    %46 = vector.multi_reduction <add>, %44, %cst_24 [0] : vector<8x1xf32> to vector<1xf32>
    %47 = vector.shape_cast %46 : vector<1xf32> to vector<1x1xf32>
    %48 = arith.addf %45, %47 : vector<1x1xf32>
    %c0_25 = arith.constant 0 : index
    %c0_26 = arith.constant 0 : index
    %49 = vector.load %arg7[%c0_25, %c0_26] : memref<1x1xf32, #tpu.memory_space<vmem>>, vector<1x1xf32>
    tpu.vector_store %arg7[%c0_25, %c0_26], %48 {strides = array<i32>} : memref<1x1xf32, #tpu.memory_space<vmem>>, vector<1x1xf32>,
    return
  }
  func.func @transform_0(%arg0: i32) -> (i32, i32) {
    %c0_i32 = arith.constant 0 : i32
    %c0_i32_0 = arith.constant 0 : i32
    %c0_i32_1 = arith.constant 0 : i32
    return %c0_i32, %c0_i32_0 : i32, i32
  }
  func.func @transform_1(%arg0: i32) -> (i32, i32) {
    %c0_i32 = arith.constant 0 : i32
    %c0_i32_0 = arith.constant 0 : i32
    %c0_i32_1 = arith.constant 0 : i32
    return %c0_i32, %c0_i32_0 : i32, i32
  }
  func.func @transform_2(%arg0: i32) -> (i32, i32) {
    %c0_i32 = arith.constant 0 : i32
    %c0_i32_0 = arith.constant 0 : i32
    %c0_i32_1 = arith.constant 0 : i32
    return %c0_i32, %c0_i32_0 : i32, i32
  }
  func.func @transform_3(%arg0: i32) -> (i32, i32) {
    %c0_i32 = arith.constant 0 : i32
    %c0_i32_0 = arith.constant 0 : i32
    return %arg0, %c0_i32 : i32, i32
  }
  func.func @transform_4(%arg0: i32) -> (i32, i32) {
    %c0_i32 = arith.constant 0 : i32
    %c0_i32_0 = arith.constant 0 : i32
    return %arg0, %c0_i32 : i32, i32
  }
  func.func @transform_5(%arg0: i32) -> (i32, i32) {
    %c0_i32 = arith.constant 0 : i32
    %c0_i32_0 = arith.constant 0 : i32
    return %arg0, %c0_i32 : i32, i32
  }
  func.func @transform_6(%arg0: i32) -> (i32, i32) {
    %c0_i32 = arith.constant 0 : i32
    %c0_i32_0 = arith.constant 0 : i32
    %c0_i32_1 = arith.constant 0 : i32
    return %c0_i32, %c0_i32_0 : i32, i32
  }
}

</mosaic_0001>

<llo_original>
// kernel: triplet_loss.2
$region0: #{triplet_loss.2}
  #allocation0 [shape = 'u32[]', space=smem, size = 0x4, offset = 0x4, fixed_abs, tag = 'smem constant byte address 0x4 - core index']
  #allocation1 [shape = 'u32[72,128]{1,0:T(1,128)}', space=vmem, size = 0x9000, scoped, tag = 'internal scratch']
  %s0 = inlined_call_operand.hbm [shape: f32[8,32], index: 0, kind: input, shape index: {}]
  %s1 = inlined_call_operand.vmem [shape: f32[8,1], index: 1, kind: output, shape index: {}]
  %s2 = sld [smem:[#allocation0]]
  $region18: #{triplet_loss.2} parent=0
    _
  %s4 = ssub.s32 1, %s2
  %s5 = scalar_select 0, %s4, %s2
  $region1: #{triplet_loss.2} parent=0
    #allocation2 [shape = 'u8[4096]{0}', space=vmem, size = 0x1000, scoped, tag = 'input window, operand 0, single buffered']
    #allocation3 [shape = 's32[1]{0}', space=sflag, size = 0x4, scoped, tag = 'scoped memory for triplet_loss.2']
    %6 = vsyncpa [#allocation3], 0
    // Predicated region
    $region2: #{triplet_loss.2} parent=1 // pred_check
      _
    $region3: #{triplet_loss.2} parent=1 // pred_check_branch
      %8 = sbr.rel (0) target = $region5
    $region4: #{triplet_loss.2} parent=1 // pred_region
      %10 = vsyncadd [#allocation3], 0
      %s12 = sshll.u32 %s0, 4
      %s13 = int_to_ptr.hbm [resolvable:$true] %s12
      %s14 = sshll.u32 [#allocation2], 4
      %s15 = int_to_ptr.vmem [resolvable:$true] %s14
      %17 = dma.hbm_to_vmem [thread:$0]  %s13, 128, %s15, [#allocation3]
    $region5: #{triplet_loss.2} parent=1 // pred_fallthru
      _
    // Predicated region
    $region6: #{triplet_loss.2} parent=1 // pred_check
      _
    $region7: #{triplet_loss.2} parent=1 // pred_check_branch
      %19 = sbr.rel (0) target = $region9
    $region8: #{triplet_loss.2} parent=1 // pred_region
      %21 = dma.done [#allocation3], 128
    $region9: #{triplet_loss.2} parent=1 // pred_fallthru
      _
    %v22 = vld [vmem:[#allocation2] sm:$0xff]
    %v23 = vmul.f32 %v22, %v22
    %vm24 = vcmask 261120
    %v25 = vsel %vm24, %v23, 0.0
    %26 = vadd.xlane.f32.xlu0 %v25
    %v27 = vpop.xlane.xlu0 %26
    %vm28 = vcmask 7168
    %29 = vst.msk [vmem:[%s1] sm:$0xff] %vm28, %v27
    // Predicated region
    $region10: #{triplet_loss.2} parent=1 // pred_check
      _
    $region11: #{triplet_loss.2} parent=1 // pred_check_branch
      %31 = sbr.rel (0) target = $region13
    $region12: #{triplet_loss.2} parent=1 // pred_region
      _
    $region13: #{triplet_loss.2} parent=1 // pred_fallthru
      _
    // Predicated region
    $region14: #{triplet_loss.2} parent=1 // pred_check
      _
    $region15: #{triplet_loss.2} parent=1 // pred_check_branch
      %33 = sbr.rel (0) target = $region17
    $region16: #{triplet_loss.2} parent=1 // pred_region
      _
    $region17: #{triplet_loss.2} parent=1 // pred_fallthru
      _
    %34 = vsyncpa [#allocation3], 1

// kernel: triplet_loss.3
$region0: #{triplet_loss.3}
  #allocation0 [shape = 'u32[]', space=smem, size = 0x4, offset = 0x4, fixed_abs, tag = 'smem constant byte address 0x4 - core index']
  #allocation1 [shape = 'u32[72,128]{1,0:T(1,128)}', space=vmem, size = 0x9000, scoped, tag = 'internal scratch']
  %s0 = inlined_call_operand.vmem [shape: f32[1,8], index: 0, kind: input, shape index: {}]
  %s1 = inlined_call_operand.vmem [shape: s32[1,8], index: 1, kind: input, shape index: {}]
  %s2 = inlined_call_operand.vmem [shape: s32[1,8], index: 2, kind: input, shape index: {}]
  %s3 = inlined_call_operand.vmem [shape: f32[8,1], index: 3, kind: input, shape index: {}]
  %s4 = inlined_call_operand.vmem [shape: s32[8,1], index: 4, kind: input, shape index: {}]
  %s5 = inlined_call_operand.vmem [shape: s32[8,1], index: 5, kind: input, shape index: {}]
  %s6 = inlined_call_operand.hbm [shape: f32[1,1], index: 6, kind: output, shape index: {}]
  %s7 = sld [smem:[#allocation0]]
  $region38: #{triplet_loss.3} parent=0
    _
  %s9 = ssub.s32 1, %s7
  %s10 = scalar_select 0, %s9, %s7
  $region1: #{triplet_loss.3} parent=0
    #allocation2 [shape = 'u8[512]{0}', space=vmem, size = 0x400, scoped, tag = 'output window, operand 0, single buffered']
    #allocation3 [shape = 's32[1]{0}', space=sflag, size = 0x4, scoped, tag = 'scoped memory for triplet_loss.3']
    %11 = vsyncpa [#allocation3], 0
    // Predicated region
    $region2: #{triplet_loss.3} parent=1 // pred_check
      _
    $region3: #{triplet_loss.3} parent=1 // pred_check_branch
      %13 = sbr.rel (0) target = $region5
    $region4: #{triplet_loss.3} parent=1 // pred_region
      _
    $region5: #{triplet_loss.3} parent=1 // pred_fallthru
      _
    // Predicated region
    $region6: #{triplet_loss.3} parent=1 // pred_check
      _
    $region7: #{triplet_loss.3} parent=1 // pred_check_branch
      %15 = sbr.rel (0) target = $region9
    $region8: #{triplet_loss.3} parent=1 // pred_region
      _
    $region9: #{triplet_loss.3} parent=1 // pred_fallthru
      _
    // Predicated region
    $region10: #{triplet_loss.3} parent=1 // pred_check
      _
    $region11: #{triplet_loss.3} parent=1 // pred_check_branch
      %17 = sbr.rel (0) target = $region13
    $region12: #{triplet_loss.3} parent=1 // pred_region
      _
    $region13: #{triplet_loss.3} parent=1 // pred_fallthru
      _
    // Predicated region
    $region14: #{triplet_loss.3} parent=1 // pred_check
      _
    $region15: #{triplet_loss.3} parent=1 // pred_check_branch
      %19 = sbr.rel (0) target = $region17
    $region16: #{triplet_loss.3} parent=1 // pred_region
      _
    $region17: #{triplet_loss.3} parent=1 // pred_fallthru
      _
    // Predicated region
    $region18: #{triplet_loss.3} parent=1 // pred_check
      _
    $region19: #{triplet_loss.3} parent=1 // pred_check_branch
      %21 = sbr.rel (0) target = $region21
    $region20: #{triplet_loss.3} parent=1 // pred_region
      _
    $region21: #{triplet_loss.3} parent=1 // pred_fallthru
      _
    // Predicated region
    $region22: #{triplet_loss.3} parent=1 // pred_check
      _
    $region23: #{triplet_loss.3} parent=1 // pred_check_branch
      %23 = sbr.rel (0) target = $region25
    $region24: #{triplet_loss.3} parent=1 // pred_region
      _
    $region25: #{triplet_loss.3} parent=1 // pred_fallthru
      _
    %p24 = scmp.eq.s32.totalorder 0, 0
    // Predicated region
    $region26: #{triplet_loss.3} parent=1 // pred_check
      %p25 = pneg %p24
    $region27: #{triplet_loss.3} parent=1 // pred_check_branch
      %27 = sbr.rel (%p25) target = $region29
    $region28: #{triplet_loss.3} parent=1 // pred_region
      %vm28 = vcmask 0
      %29 = vst.msk [vmem:[#allocation2] sm:$0x1] %vm28, 0.0
    $region29: #{triplet_loss.3} parent=1 // pred_fallthru
      _
    %v30 = vld [vmem:[%s4] sm:$0xff]
    %v31 = vld [vmem:[%s1] sm:$0x1]
    %32 = vset.pattern.permute.xlu0 0
    %33 = vperm.xlu0 %32, %v30
    %v34 = vpop.permute.xlu0 %33
    %v35 = vperm.slane %v31, 0
    %vm36 = vcmp.eq.s32.totalorder %v34, %v35
    %v37 = vld [vmem:[%s2] sm:$0x1]
    %vm38 = vcmp.ne.s32.totalorder %v37, 0
    %v39 = vsel %vm38, 1, 0
    %v40 = vperm.slane %v39, 0
    %vm41 = vcmp.eq.s32.totalorder %v40, 1
    %vm42 = vmand %vm36, %vm41
    %v43 = vld [vmem:[%s0] sm:$0x1]
    %v45 = vperm.slane %v43, 0
    %v47 = vsel %vm42, %v45, -inf
    %vm48 = vcmask 64512
    %v49 = vsel %vm48, %v47, -inf
    %50 = vmax.xlane.f32.xlu0 %v49
    %v51 = vpop.xlane.xlu0 %50
    %v52 = vsel %vm42, %v45, inf
    %v53 = vsel %vm48, %v52, inf
    %54 = vmin.xlane.f32.xlu0 %v53
    %v55 = vpop.xlane.xlu0 %54
    %v56 = vld [vmem:[%s3] sm:$0xff]
    %v57 = vadd.f32 %v56, %v51
    %v58 = vmax.f32 %v57, 1e-12
    %v59 = vrsqrt.pop %v58
    %v60 = vmul.f32 %v59, %v58
    %v61 = vmul.f32 %v60, %v59
    %v62 = vmul.f32 0.5, %v61
    %v63 = vsub.f32 1.5, %v62
    %v64 = vmul.f32 %v59, %v63
    %v65 = vmul.f32 %v58, %v64
    %vm66 = vcmp.eq.f32.partialorder %v58, inf
    %v67 = vsel %vm66, %v58, %v65
    %vm68 = vcmp.eq.f32.partialorder %v58, 0.0
    %v69 = vand.u32 %v58, 2147483648
    %v70 = vsel %vm68, %v69, %v67
    %v71 = vadd.f32 %v56, %v55
    %v72 = vmax.f32 %v71, 1e-12
    %v73 = vrsqrt.pop %v72
    %v74 = vmul.f32 %v73, %v72
    %v75 = vmul.f32 %v74, %v73
    %v76 = vmul.f32 0.5, %v75
    %v77 = vsub.f32 1.5, %v76
    %v78 = vmul.f32 %v73, %v77
    %v79 = vmul.f32 %v72, %v78
    %vm80 = vcmp.eq.f32.partialorder %v72, inf
    %v81 = vsel %vm80, %v72, %v79
    %vm82 = vcmp.eq.f32.partialorder %v72, 0.0
    %v83 = vand.u32 %v72, 2147483648
    %v84 = vsel %vm82, %v83, %v81
    %v85 = vsub.f32 %v70, %v84
    %v86 = vadd.f32 %v85, 0.3
    %v87 = vmax.f32 %v86, 0.0
    %v88 = vld [vmem:[%s5] sm:$0xff]
    %vm89 = vcmp.ne.s32.totalorder %v88, 0
    %v90 = vsel %vm89, %v87, 0.0
    %v91 = vld [vmem:[#allocation2] sm:$0x1]
    %vm92 = vcmask 7168
    %v93 = vsel %vm92, %v90, 0.0
    %v94 = vrot.slane %v93, 4
    %v95 = vadd.f32 %v93, %v94
    %v96 = vrot.slane %v95, 2
    %v97 = vadd.f32 %v95, %v96
    %v98 = vrot.slane %v97, 1
    %v99 = vadd.f32 %v97, %v98
    %v100 = vadd.f32 %v91, %v99
    %vm101 = vcmask 0
    %102 = vst.msk [vmem:[#allocation2] sm:$0x1] %vm101, %v100
    // Predicated region
    $region30: #{triplet_loss.3} parent=1 // pred_check
      _
    $region31: #{triplet_loss.3} parent=1 // pred_check_branch
      %104 = sbr.rel (0) target = $region33
    $region32: #{triplet_loss.3} parent=1 // pred_region
      %106 = vsyncadd [#allocation3], 0
      %s108 = sshll.u32 [#allocation2], 4
      %s109 = int_to_ptr.vmem [resolvable:$true] %s108
      %s110 = sshll.u32 %s6, 4
      %s111 = int_to_ptr.hbm [resolvable:$true] %s110
      %113 = dma.vmem_to_hbm [thread:$0]  %s109, 16, %s111, [#allocation3]
    $region33: #{triplet_loss.3} parent=1 // pred_fallthru
      _
    // Predicated region
    $region34: #{triplet_loss.3} parent=1 // pred_check
      _
    $region35: #{triplet_loss.3} parent=1 // pred_check_branch
      %115 = sbr.rel (0) target = $region37
    $region36: #{triplet_loss.3} parent=1 // pred_region
      %117 = dma.done [#allocation3], 16
    $region37: #{triplet_loss.3} parent=1 // pred_fallthru
      _
    %118 = vsyncpa [#allocation3], 1

</llo_original>
